<compile_context>
chip_gen: v7x
topology: tpu7x:2x2x1
jax: 0.10.0
libtpu: 0.0.40
codegen_flags: <defaults>
</compile_context>

<pallas_src>
import numpy as np
import jax
import jax.numpy as jnp
from jax.experimental import pallas as pl
from jax.experimental.pallas import tpu as pltpu


def _identity_kernel(x_ref, o_ref):
    # Hot path of the (empty) forward: pure pass-through of the tile.
    o_ref[...] = x_ref[...]


def _sublane_pack(itemsize: int) -> int:
    # Rows-per-packed-tile: f32 -> 8, bf16/f16 -> 16, int8/fp8 -> 32.
    return 8 * max(1, 4 // itemsize)


def _choose_layout(total: int, itemsize: int):
    """Pick a lane-dense (rows, lanes) slab plus a row-tile size.

    Returns (lanes, block_rows, padded_rows) where lanes is a multiple of 128,
    block_rows is a multiple of the sublane packing factor, and padded_rows is
    a multiple of block_rows (so the grid divides evenly).
    """
    pack = _sublane_pack(itemsize)

    # Prefer the widest lane count that divides the array and still leaves
    # at least one full sublane-packed tile of rows.
    lanes = 128
    for cand in (2048, 1024, 512, 256, 128):
        if total % cand == 0 and total // cand >= pack:
            lanes = cand
            break

    rows = -(-total // lanes)  # ceil-div; >0 padding only for odd sizes

    # Row tile targeting ~8 MiB blocks: double-buffered in+out is 32 MiB,
    # which fits every generation's VMEM with headroom.
    target = max(pack, (8 * 1024 * 1024) // (lanes * itemsize))
    target -= target % pack
    rows_up = -(-rows // pack) * pack
    block_rows = min(target, rows_up)
    padded_rows = -(-rows // block_rows) * block_rows
    return lanes, block_rows, padded_rows


def _the_model_forward_impl(x: jax.Array) -> jax.Array:
    """Pallas implementation of TheModel.forward (a no-op / identity)."""
    orig_shape = x.shape
    total = x.size
    itemsize = jnp.dtype(x.dtype).itemsize

    lanes, block_rows, padded_rows = _choose_layout(total, itemsize)
    padded_total = padded_rows * lanes

    flat = x.reshape(-1)  # free reshape of a contiguous array
    if padded_total != total:
        # Pad to a lane-dense, evenly tiled slab instead of falling back to a
        # single full-array block (keeps every block pipelined and VMEM-safe).
        flat = jnp.pad(flat, (0, padded_total - total))
    x2d = flat.reshape(padded_rows, lanes)

    grid = (padded_rows // block_rows,)

    out2d = pl.pallas_call(
        _identity_kernel,
        out_shape=jax.ShapeDtypeStruct((padded_rows, lanes), x.dtype),
        grid_spec=pltpu.PrefetchScalarGridSpec(
            num_scalar_prefetch=0,
            grid=grid,
            in_specs=[pl.BlockSpec((block_rows, lanes), lambda i: (i, 0))],
            out_specs=pl.BlockSpec((block_rows, lanes), lambda i: (i, 0)),
        ),
        # Pure bandwidth op: 1 read + 1 write of the slab.
        cost_estimate=pl.CostEstimate(
            flops=0,
            transcendentals=0,
            bytes_accessed=2 * padded_total * itemsize,
        ),
        compiler_params=pltpu.CompilerParams(
            dimension_semantics=("parallel",),
            # 2 bufs * (in + out) * 8 MiB = 32 MiB; 48 MiB leaves headroom and
            # is valid on v5e/v6e (128 MiB physical) and v7x (64 MiB physical).
            vmem_limit_bytes=48 * 1024 * 1024,
        ),
    )(x2d)

    out = out2d.reshape(-1)
    if padded_total != total:
        out = out[:total]
    return out.reshape(orig_shape)


the_model_forward = jax.jit(_the_model_forward_impl)


if __name__ == "__main__":
    key = jax.random.PRNGKey(0)
    # Small NCHW input consistent with a typical conv-style module.
    x = jax.random.normal(key, (2, 4, 16, 16), dtype=jnp.float32)
    x_host = np.asarray(jax.device_get(x))

    y = the_model_forward(x)
    jax.block_until_ready(y)

    # Sanity check: forward is a no-op, so output must equal input exactly.
    assert y.shape == x.shape
    assert y.dtype == x.dtype
    assert np.array_equal(np.asarray(jax.device_get(y)), x_host)

    print("KERNEL_OK")
</pallas_src>

<mosaic_0001>
module attributes {stable_mosaic.version = 11 : i64} {
  func.func @_identity_kernel(%arg0: i32, %arg1: memref<8x256xf32, #tpu.memory_space<vmem>>, %arg2: memref<8x256xf32, #tpu.memory_space<vmem>>) attributes {dimension_semantics = [#tpu.dimension_semantics<parallel>], iteration_bounds = array<i64: 1>, scalar_prefetch = 0 : i64, scratch_operands = 0 : i64, tpu.core_type = #tpu.core_type<tc>, window_params = [{transform_indices = @transform_0, window_bounds = array<i64: 8, 256>}, {transform_indices = @transform_1, window_bounds = array<i64: 8, 256>}]} {
    %c0 = arith.constant 0 : index
    %c0_0 = arith.constant 0 : index
    %0 = vector.load %arg1[%c0, %c0_0] : memref<8x256xf32, #tpu.memory_space<vmem>>, vector<8x256xf32>
    %c0_1 = arith.constant 0 : index
    %c0_2 = arith.constant 0 : index
    %1 = vector.load %arg2[%c0_1, %c0_2] : memref<8x256xf32, #tpu.memory_space<vmem>>, vector<8x256xf32>
    tpu.vector_store %arg2[%c0_1, %c0_2], %0 {strides = array<i32>} : memref<8x256xf32, #tpu.memory_space<vmem>>, vector<8x256xf32>,
    return
  }
  func.func @transform_0(%arg0: i32) -> (i32, i32) {
    %c0_i32 = arith.constant 0 : i32
    %c0_i32_0 = arith.constant 0 : i32
    return %arg0, %c0_i32 : i32, i32
  }
  func.func @transform_1(%arg0: i32) -> (i32, i32) {
    %c0_i32 = arith.constant 0 : i32
    %c0_i32_0 = arith.constant 0 : i32
    return %arg0, %c0_i32 : i32, i32
  }
}

</mosaic_0001>

<llo_original>
// kernel: _the_model_forward_impl.1
$region0: #{_the_model_forward_impl.1}
  #allocation0 [shape = 'u32[]', space=smem, size = 0x4, offset = 0x4, fixed_abs, tag = 'smem constant byte address 0x4 - core index']
  #allocation1 [shape = 'u32[144,128]{1,0:T(1,128)}', space=vmem, size = 0x12000, scoped, tag = 'internal scratch']
  %s0 = inlined_call_operand.vmem [shape: f32[8,256], index: 0, kind: input, shape index: {}]
  %s1 = inlined_call_operand.vmem [shape: f32[8,256], index: 1, kind: output, shape index: {}]
  %s2 = sld [smem:[#allocation0]]
  $region14: #{_the_model_forward_impl.1} parent=0
    _
  %s4 = ssub.s32 1, %s2
  %s5 = scalar_select 0, %s4, %s2
  // Predicated region
  $region2: #{_the_model_forward_impl.1} parent=0 // pred_check
    _
  $region3: #{_the_model_forward_impl.1} parent=0 // pred_check_branch
    %7 = sbr.rel (0) target = $region5
  $region4: #{_the_model_forward_impl.1} parent=0 // pred_region
    _
  $region5: #{_the_model_forward_impl.1} parent=0 // pred_fallthru
    _
  %v8 = vld [vmem:[%s0] sm:$0xff]
  %v9 = vld [vmem:[%s0 + $0x8] sm:$0xff]
  %10 = vst [vmem:[%s1] sm:$0xff] %v8
  %11 = vst [vmem:[%s1 + $0x8] sm:$0xff] %v9
  // Predicated region
  $region6: #{_the_model_forward_impl.1} parent=0 // pred_check
    _
  $region7: #{_the_model_forward_impl.1} parent=0 // pred_check_branch
    %13 = sbr.rel (0) target = $region9
  $region8: #{_the_model_forward_impl.1} parent=0 // pred_region
    _
  $region9: #{_the_model_forward_impl.1} parent=0 // pred_fallthru
    _
  // Predicated region
  $region10: #{_the_model_forward_impl.1} parent=0 // pred_check
    _
  $region11: #{_the_model_forward_impl.1} parent=0 // pred_check_branch
    %15 = sbr.rel (0) target = $region13
  $region12: #{_the_model_forward_impl.1} parent=0 // pred_region
    _
  $region13: #{_the_model_forward_impl.1} parent=0 // pred_fallthru
    _

</llo_original>
